<compile_context>
chip_gen: v7x
topology: tpu7x:2x2x1
jax: 0.10.0
libtpu: 0.0.40
codegen_flags: <defaults>
</compile_context>

<pallas_src>
import jax
import jax.numpy as jnp
from jax import lax
from jax.experimental import pallas as pl
from jax.experimental.pallas import tpu as pltpu

LN_EPS = 1e-5  # nn.LayerNorm default eps


def elayer_kernel(params_ref, x_ref, col_ref, o_ref):
    # params_ref: SMEM (6,) f32 = [S_wg, S_bg, a, 2*c_x, c0 + eps, O*sum(beta)]
    # x_ref:      VMEM (tm, O)  input block in natural layout
    # col_ref:    VMEM (1, E)   col_sum = proj_out.sum(0)  (constant across grid)
    # o_ref:      VMEM (tm, E)  final output block
    s_wg = params_ref[0]
    s_bg = params_ref[1]
    a = params_ref[2]
    two_cx = params_ref[3]
    c0_eps = params_ref[4]
    o_sum_beta = params_ref[5]

    x = x_ref[...].astype(jnp.float32)                      # (tm, O)
    num = x * s_wg + s_bg                                    # VPU
    den = (a * x + two_cx) * x + c0_eps                      # Horner; always >= eps > 0
    s = num * lax.rsqrt(den)                                 # rsqrt -> EUP slot (co-issues)

    # Exact f32 reduction over O, then add O*sum(beta); per-row scalar.
    row = jnp.sum(s, axis=-1, keepdims=True) + o_sum_beta    # (tm, 1)

    # Fused rank-1 outer product: out[r, d] = row[r] * col_sum[d].
    o_ref[...] = (row * col_ref[...]).astype(o_ref.dtype)    # (tm,1)*(1,E) -> (tm,E)


def _pick_row_tile(n_rows, max_rows):
    """Row tile: multiple of 8, <= max_rows, and >= 2 grid steps when possible (v7x)."""
    if n_rows <= 8:
        return n_rows                       # single tiny block (full dim)
    tm = min(max_rows, pl.cdiv(n_rows, 2))  # aim for at least two grid steps
    tm = max(8, (tm // 8) * 8)              # sublane-aligned
    return tm


def elayer_forward(x, w, b, gamma, beta, proj_out, *, max_rows=8192):
    B, S, O = x.shape
    P, E = proj_out.shape
    R = B * S

    f32 = jnp.float32
    w32, b32 = w.astype(f32), b.astype(f32)
    g32, beta32 = gamma.astype(f32), beta.astype(f32)
    wc = w32 - jnp.mean(w32)
    bc = b32 - jnp.mean(b32)
    params = jnp.stack([
        jnp.sum(wc * g32),                 # S_wg
        jnp.sum(bc * g32),                 # S_bg
        jnp.mean(wc * wc),                 # a
        2.0 * jnp.mean(wc * bc),           # 2*c_x
        jnp.mean(bc * bc) + LN_EPS,        # c0 + eps
        float(O) * jnp.sum(beta32),        # O * sum(beta)
    ]).astype(f32)
    col_sum = jnp.sum(proj_out.astype(f32), axis=0).reshape(1, E)   # (1, E)

    # Leading-dim merge only -- no relayout / pad copy of x.
    x2d = x.reshape(R, O)

    tm = _pick_row_tile(R, max_rows)
    grid = (pl.cdiv(R, tm),)

    out = pl.pallas_call(
        elayer_kernel,
        out_shape=jax.ShapeDtypeStruct((R, E), x.dtype),
        grid_spec=pltpu.PrefetchScalarGridSpec(
            num_scalar_prefetch=0,
            grid=grid,
            in_specs=[
                pl.BlockSpec(memory_space=pltpu.MemorySpace.SMEM),  # 6 precomputed scalars
                pl.BlockSpec((tm, O), lambda i: (i, 0)),            # x, natural layout
                pl.BlockSpec((1, E), lambda i: (0, 0)),             # col_sum (constant)
            ],
            out_specs=pl.BlockSpec((tm, E), lambda i: (i, 0)),      # final output, fused
        ),
        compiler_params=pltpu.CompilerParams(
            dimension_semantics=("parallel",),
            vmem_limit_bytes=32 * 1024 * 1024,
        ),
    )(params, x2d, col_sum)

    return out.reshape(B, S, E)


def elayer_ref(x, w, b, gamma, beta, proj_out):
    """Pure-JAX reference matching the PyTorch forward exactly."""
    y = x[..., None] * w[None, None, None, :] + b            # (B,S,O,P)
    mean = y.mean(-1, keepdims=True)
    var = ((y - mean) ** 2).mean(-1, keepdims=True)
    ln = (y - mean) / jnp.sqrt(var + LN_EPS) * gamma + beta
    return jnp.einsum('bsop,ed->bsd', ln, proj_out)


if __name__ == "__main__":
    # Small shapes consistent with the module.
    embedding_dim = 32
    proj_dim = embedding_dim * 2   # P = 64
    B, S, O = 2, 8, 16             # x: (B, S, O) -> R = 16 rows -> grid of 2 blocks

    key = jax.random.PRNGKey(0)
    kx, kw, kb, kg, kbe, kp = jax.random.split(key, 6)

    x = jax.random.normal(kx, (B, S, O), dtype=jnp.float32)
    # nn.Linear(1, proj_dim): weight (P, 1) -> stored here as (P,), bias (P,)
    lin_w = jax.random.normal(kw, (proj_dim,), dtype=jnp.float32) * 0.5
    lin_b = jax.random.normal(kb, (proj_dim,), dtype=jnp.float32) * 0.1
    # nn.LayerNorm(proj_dim) params (random so the output is non-trivial).
    ln_g = 1.0 + 0.1 * jax.random.normal(kg, (proj_dim,), dtype=jnp.float32)
    ln_b = 0.1 * jax.random.normal(kbe, (proj_dim,), dtype=jnp.float32)
    # nn.Parameter(torch.rand(proj_dim, embedding_dim))
    proj_out = jax.random.uniform(kp, (proj_dim, embedding_dim), dtype=jnp.float32)

    out = elayer_forward(x, lin_w, lin_b, ln_g, ln_b, proj_out)
    out = jax.block_until_ready(out)

    ref = elayer_ref(x, lin_w, lin_b, ln_g, ln_b, proj_out)
    assert out.shape == (B, S, embedding_dim)
    # Algebraic collapse reassociates float ops -> agreement to ~1e-5 relative, not bitwise.
    assert jnp.allclose(out, ref, rtol=1e-4, atol=1e-2), "mismatch vs reference"

    print("KERNEL_OK")
</pallas_src>

<mosaic_0001>
module attributes {stable_mosaic.version = 11 : i64} {
  func.func @elayer_kernel(%arg0: i32, %arg1: memref<6xf32, #tpu.memory_space<smem>>, %arg2: memref<8x16xf32, #tpu.memory_space<vmem>>, %arg3: memref<1x32xf32, #tpu.memory_space<vmem>>, %arg4: memref<8x32xf32, #tpu.memory_space<vmem>>) attributes {dimension_semantics = [#tpu.dimension_semantics<parallel>], iteration_bounds = array<i64: 2>, scalar_prefetch = 0 : i64, scratch_operands = 0 : i64, tpu.core_type = #tpu.core_type<tc>, window_params = [{transform_indices = @transform_0, window_bounds = array<i64: 6>}, {transform_indices = @transform_1, window_bounds = array<i64: 8, 16>}, {pipeline_mode = #tpu.pipeline_mode<synchronous>, transform_indices = @transform_2, window_bounds = array<i64: 1, 32>}, {transform_indices = @transform_3, window_bounds = array<i64: 8, 32>}]} {
    %c0 = arith.constant 0 : index
    %0 = memref.load %arg1[%c0] : memref<6xf32, #tpu.memory_space<smem>>
    %c1 = arith.constant 1 : index
    %1 = memref.load %arg1[%c1] : memref<6xf32, #tpu.memory_space<smem>>
    %c2 = arith.constant 2 : index
    %2 = memref.load %arg1[%c2] : memref<6xf32, #tpu.memory_space<smem>>
    %c3 = arith.constant 3 : index
    %3 = memref.load %arg1[%c3] : memref<6xf32, #tpu.memory_space<smem>>
    %c4 = arith.constant 4 : index
    %4 = memref.load %arg1[%c4] : memref<6xf32, #tpu.memory_space<smem>>
    %c5 = arith.constant 5 : index
    %5 = memref.load %arg1[%c5] : memref<6xf32, #tpu.memory_space<smem>>
    %c0_0 = arith.constant 0 : index
    %c0_1 = arith.constant 0 : index
    %6 = vector.load %arg2[%c0_0, %c0_1] : memref<8x16xf32, #tpu.memory_space<vmem>>, vector<8x16xf32>
    %7 = vector.broadcast %0 : f32 to vector<8x16xf32>
    %8 = arith.mulf %6, %7 : vector<8x16xf32>
    %9 = vector.broadcast %1 : f32 to vector<8x16xf32>
    %10 = arith.addf %8, %9 : vector<8x16xf32>
    %11 = vector.broadcast %2 : f32 to vector<8x16xf32>
    %12 = arith.mulf %11, %6 : vector<8x16xf32>
    %13 = vector.broadcast %3 : f32 to vector<8x16xf32>
    %14 = arith.addf %12, %13 : vector<8x16xf32>
    %15 = arith.mulf %14, %6 : vector<8x16xf32>
    %16 = vector.broadcast %4 : f32 to vector<8x16xf32>
    %17 = arith.addf %15, %16 : vector<8x16xf32>
    %18 = math.rsqrt %17 : vector<8x16xf32>
    %19 = arith.mulf %10, %18 : vector<8x16xf32>
    %cst = arith.constant dense<0.000000e+00> : vector<8xf32>
    %20 = vector.multi_reduction <add>, %19, %cst [1] : vector<8x16xf32> to vector<8xf32>
    %21 = vector.shape_cast %20 : vector<8xf32> to vector<8x1xf32>
    %22 = vector.broadcast %5 : f32 to vector<8x1xf32>
    %23 = arith.addf %21, %22 : vector<8x1xf32>
    %c0_2 = arith.constant 0 : index
    %c0_3 = arith.constant 0 : index
    %24 = vector.load %arg3[%c0_2, %c0_3] : memref<1x32xf32, #tpu.memory_space<vmem>>, vector<1x32xf32>
    %25 = vector.broadcast %23 : vector<8x1xf32> to vector<8x32xf32>
    %26 = vector.broadcast %24 : vector<1x32xf32> to vector<8x32xf32>
    %27 = arith.mulf %25, %26 : vector<8x32xf32>
    %c0_4 = arith.constant 0 : index
    %c0_5 = arith.constant 0 : index
    %28 = vector.load %arg4[%c0_4, %c0_5] : memref<8x32xf32, #tpu.memory_space<vmem>>, vector<8x32xf32>
    tpu.vector_store %arg4[%c0_4, %c0_5], %27 {strides = array<i32>} : memref<8x32xf32, #tpu.memory_space<vmem>>, vector<8x32xf32>,
    return
  }
  func.func @transform_0(%arg0: i32) -> i32 {
    %c0_i32 = arith.constant 0 : i32
    %c0_i32_0 = arith.constant 0 : i32
    return %c0_i32 : i32
  }
  func.func @transform_1(%arg0: i32) -> (i32, i32) {
    %c0_i32 = arith.constant 0 : i32
    %c0_i32_0 = arith.constant 0 : i32
    return %arg0, %c0_i32 : i32, i32
  }
  func.func @transform_2(%arg0: i32) -> (i32, i32) {
    %c0_i32 = arith.constant 0 : i32
    %c0_i32_0 = arith.constant 0 : i32
    %c0_i32_1 = arith.constant 0 : i32
    return %c0_i32, %c0_i32_0 : i32, i32
  }
  func.func @transform_3(%arg0: i32) -> (i32, i32) {
    %c0_i32 = arith.constant 0 : i32
    %c0_i32_0 = arith.constant 0 : i32
    return %arg0, %c0_i32 : i32, i32
  }
}

</mosaic_0001>

<llo_original>
// kernel: tpu_custom_call.1
$region0: #{tpu_custom_call.1}
  #allocation0 [shape = 'u32[]', space=smem, size = 0x4, offset = 0x4, fixed_abs, tag = 'smem constant byte address 0x4 - core index']
  #allocation1 [shape = 'u32[144,128]{1,0:T(1,128)}', space=vmem, size = 0x12000, scoped, tag = 'internal scratch']
  %s0 = inlined_call_operand.hbm [shape: f32[6], index: 0, kind: input, shape index: {}]
  %s1 = inlined_call_operand.hbm [shape: f32[16,16], index: 1, kind: input, shape index: {}]
  %s2 = inlined_call_operand.vmem [shape: f32[1,32], index: 2, kind: input, shape index: {}]
  %s3 = inlined_call_operand.hbm [shape: f32[16,32], index: 3, kind: output, shape index: {}]
  %s4 = sld [smem:[#allocation0]]
  $region53: #{tpu_custom_call.1} parent=0
    _
  %s6 = ssub.s32 1, %s4
  %s7 = scalar_select 0, %s6, %s4
  $region1: #{tpu_custom_call.1} parent=0
    #allocation2 [shape = 'u8[512]{0}', space=smem, size = 0x200, scoped, tag = 'input window, operand 0, single buffered']
    #allocation3 [shape = 's32[2]{0}', space=sflag, size = 0x8, scoped, tag = 'scoped memory for tpu_custom_call.1']
    #allocation4 [shape = 's32[2]{0}', space=sflag, size = 0x8, scoped, tag = 'scoped memory for tpu_custom_call.1']
    #allocation5 [shape = 's32[2]{0}', space=sflag, size = 0x8, scoped, tag = 'scoped memory for tpu_custom_call.1']
    #allocation6 [shape = 'u8[8192]{0}', space=vmem, size = 0x2000, scoped, tag = 'input window, operand 1']
    #allocation7 [shape = 'u8[8192]{0}', space=vmem, size = 0x2000, scoped, tag = 'output window, operand 0']
    %8 = vsyncpa [#allocation5], 0
    %9 = vsyncpa [#allocation3], 0
    %s10 = scalar_lea.sflag [#allocation3], 1
    %11 = vsyncpa %s10, 0
    %12 = vsyncpa [#allocation4], 0
    %s13 = scalar_lea.sflag [#allocation4], 1
    %14 = vsyncpa %s13, 0
    loop: start=0, step=1, limit=4
    $region2: #{tpu_custom_call.1} parent=1 // loop_pre_header
      _
    $region3: #{tpu_custom_call.1} parent=1 // loop_header
      %s16 = sphi 0, %s20
      %p17 = scmp.ge.s32.totalorder %s16, 4
      %s24 = sphi 0, %s24
      %s26 = sphi 0, %s24
      %s27 = sphi 0, %s26
      %s41 = sphi 0, %s27
      %s47 = sphi 0, %s49
      %s50 = sphi 0, %s47
      %s51 = sphi 0, %s50
      %s67 = sphi 0, %s51
      %s71 = sphi 0, %s71
      %s73 = sphi 0, %s71
      %s74 = sphi 0, %s73
      %s88 = sphi 0, %s74
      %s94 = sphi 0, %s96
      %s97 = sphi 0, %s94
      %s98 = sphi 0, %s97
      %s114 = sphi 0, %s98
    $region4: #{tpu_custom_call.1} parent=1 // loop_header_branch
      %19 = sbr.rel (%p17) target = $region8
    $region5: #{tpu_custom_call.1} parent=1 // loop_body
      %s21 = ssub.s32 %s16, 1
      %s22 = ssub.s32 %s16, 2
      %s23 = sadd.s32 %s16, 1
      %s25 = sadd.s32 %s24, 1
      %p28 = scmp.eq.s32.totalorder %s16, 1
      %p29 = scmp.ne.s32.totalorder %s24, %s26
      %p30 = scmp.eq.s32.totalorder %s16, 0
      %p31 = por %p29, %p30
      %p32 = scmp.ne.s32.totalorder %s24, %s26
      %p33 = scmp.eq.s32.totalorder %s21, 1
      %p34 = por %p32, %p33
      %p35 = scmp.ne.s32.totalorder %s26, %s27
      %p36 = scmp.eq.s32.totalorder %s21, 0
      %p37 = por %p35, %p36
      %p38 = scmp.ne.s32.totalorder %s26, %s27
      %p39 = scmp.eq.s32.totalorder %s22, 1
      %p40 = por %p38, %p39
      %p42 = scmp.ne.s32.totalorder %s27, %s41
      %p43 = scmp.eq.s32.totalorder %s22, 0
      %p44 = por %p42, %p43
      %s45 = ssub.s32 %s16, %s23
      %p46 = scmp.eq.s32.totalorder %s45, 0
      %s48 = sadd.s32 %s47, 1
      %s49 = scalar_select %p46, %s47, %s48
      %p52 = pneg %p46
      %p53 = scmp.eq.s32.totalorder %s16, 1
      %p54 = por %p52, %p53
      %p55 = scmp.ne.s32.totalorder %s47, %s50
      %p56 = scmp.eq.s32.totalorder %s16, 0
      %p57 = por %p55, %p56
      %p58 = scmp.ne.s32.totalorder %s47, %s50
      %p59 = scmp.eq.s32.totalorder %s21, 1
      %p60 = por %p58, %p59
      %p61 = scmp.ne.s32.totalorder %s50, %s51
      %p62 = scmp.eq.s32.totalorder %s21, 0
      %p63 = por %p61, %p62
      %p64 = scmp.ne.s32.totalorder %s50, %s51
      %p65 = scmp.eq.s32.totalorder %s22, 1
      %p66 = por %p64, %p65
      %p68 = scmp.ne.s32.totalorder %s51, %s67
      %p69 = scmp.eq.s32.totalorder %s22, 0
      %p70 = por %p68, %p69
      %s72 = sadd.s32 %s71, 1
      %p75 = scmp.eq.s32.totalorder %s16, 1
      %p76 = scmp.ne.s32.totalorder %s71, %s73
      %p77 = scmp.eq.s32.totalorder %s16, 0
      %p78 = por %p76, %p77
      %p79 = scmp.ne.s32.totalorder %s71, %s73
      %p80 = scmp.eq.s32.totalorder %s21, 1
      %p81 = por %p79, %p80
      %p82 = scmp.ne.s32.totalorder %s73, %s74
      %p83 = scmp.eq.s32.totalorder %s21, 0
      %p84 = por %p82, %p83
      %p85 = scmp.ne.s32.totalorder %s73, %s74
      %p86 = scmp.eq.s32.totalorder %s22, 1
      %p87 = por %p85, %p86
      %p89 = scmp.ne.s32.totalorder %s74, %s88
      %p90 = scmp.eq.s32.totalorder %s22, 0
      %p91 = por %p89, %p90
      %s92 = ssub.s32 %s16, %s23
      %p93 = scmp.eq.s32.totalorder %s92, 0
      %s95 = sadd.s32 %s94, 1
      %s96 = scalar_select %p93, %s94, %s95
      %p99 = pneg %p93
      %p100 = scmp.eq.s32.totalorder %s16, 1
      %p101 = por %p99, %p100
      %p102 = scmp.ne.s32.totalorder %s94, %s97
      %p103 = scmp.eq.s32.totalorder %s16, 0
      %p104 = por %p102, %p103
      %p105 = scmp.ne.s32.totalorder %s94, %s97
      %p106 = scmp.eq.s32.totalorder %s21, 1
      %p107 = por %p105, %p106
      %p108 = scmp.ne.s32.totalorder %s97, %s98
      %p109 = scmp.eq.s32.totalorder %s21, 0
      %p110 = por %p108, %p109
      %p111 = scmp.ne.s32.totalorder %s97, %s98
      %p112 = scmp.eq.s32.totalorder %s22, 1
      %p113 = por %p111, %p112
      %p115 = scmp.ne.s32.totalorder %s98, %s114
      %p116 = scmp.eq.s32.totalorder %s22, 0
      %p117 = por %p115, %p116
      %p118 = scmp.le.s32.totalorder 1, %s16
      %p119 = scmp.lt.s32.totalorder %s16, 3
      %p120 = pnand %p118, %p119
      %p121 = pneg %p120
      // Predicated region
      $region9: #{tpu_custom_call.1} parent=5 // pred_check
        _
      $region10: #{tpu_custom_call.1} parent=5 // pred_check_branch
        %123 = sbr.rel (%p120) target = $region12
      $region11: #{tpu_custom_call.1} parent=5 // pred_region
        %s124 = ssub.s32 %s16, 1
        // Predicated region
        $region13: #{tpu_custom_call.1} parent=11 // pred_check
          %p125 = pneg %p37
        $region14: #{tpu_custom_call.1} parent=11 // pred_check_branch
          %127 = sbr.rel (%p125) target = $region16
        $region15: #{tpu_custom_call.1} parent=11 // pred_region
          %s129 = ssub.s32 16, 16
          %130 = vsyncadd [#allocation5], %s129
          %133 = dma.hbm_to_smem %s0, 16, [#allocation2], [#allocation5]
        $region16: #{tpu_custom_call.1} parent=11 // pred_fallthru
          _
        // Predicated region
        $region17: #{tpu_custom_call.1} parent=11 // pred_check
          %p134 = pneg %p84
        $region18: #{tpu_custom_call.1} parent=11 // pred_check_branch
          %136 = sbr.rel (%p134) target = $region20
        $region19: #{tpu_custom_call.1} parent=11 // pred_region
          _
        $region20: #{tpu_custom_call.1} parent=11 // pred_fallthru
          _
      $region12: #{tpu_custom_call.1} parent=5 // pred_fallthru
        _
      %p137 = scmp.lt.s32.totalorder %s16, 2
      // Predicated region
      $region21: #{tpu_custom_call.1} parent=5 // pred_check
        %p138 = pneg %p137
      $region22: #{tpu_custom_call.1} parent=5 // pred_check_branch
        %140 = sbr.rel (%p138) target = $region24
      $region23: #{tpu_custom_call.1} parent=5 // pred_region
        // Predicated region
        $region25: #{tpu_custom_call.1} parent=23 // pred_check
          %p141 = pneg %p57
        $region26: #{tpu_custom_call.1} parent=23 // pred_check_branch
          %143 = sbr.rel (%p141) target = $region28
        $region27: #{tpu_custom_call.1} parent=23 // pred_region
          %s144 = sand.u32 %s47, 1
          %s145 = scalar_lea.sflag [#allocation3], %s144
          %s146 = sand.u32 %s47, 1
          %s147 = smul.addr %s146, 8
          %s148 = scalar_lea.vmem [#allocation6], %s147
          %s150 = ssub.s32 128, 128
          %151 = vsyncadd %s145, %s150
          %s152 = smul.addr %s16, 128
          %s153 = scalar_lea.hbm %s1, %s152
          %s155 = sshll.u32 %s148, 4
          %s156 = int_to_ptr.vmem [resolvable:$true] %s155
          %158 = dma.hbm_to_vmem [thread:$0]  %s153, 128, %s156, %s145
        $region28: #{tpu_custom_call.1} parent=23 // pred_fallthru
          _
      $region24: #{tpu_custom_call.1} parent=5 // pred_fallthru
        _
      %p159 = scmp.le.s32.totalorder 1, %s16
      %p160 = scmp.lt.s32.totalorder %s16, 3
      %p161 = pnand %p159, %p160
      %p162 = pneg %p161
      // Predicated region
      $region29: #{tpu_custom_call.1} parent=5 // pred_check
        _
      $region30: #{tpu_custom_call.1} parent=5 // pred_check_branch
        %164 = sbr.rel (%p161) target = $region32
      $region31: #{tpu_custom_call.1} parent=5 // pred_region
        %s165 = ssub.s32 %s16, 1
        // Predicated region
        $region33: #{tpu_custom_call.1} parent=31 // pred_check
          %p166 = pneg %p37
        $region34: #{tpu_custom_call.1} parent=31 // pred_check_branch
          %168 = sbr.rel (%p166) target = $region36
        $region35: #{tpu_custom_call.1} parent=31 // pred_region
          %169 = dma.done [#allocation5], 16
        $region36: #{tpu_custom_call.1} parent=31 // pred_fallthru
          _
        %s170 = sand.u32 %s50, 1
        %s171 = scalar_lea.sflag [#allocation3], %s170
        %s172 = sand.u32 %s50, 1
        %s173 = smul.addr %s172, 8
        %s174 = scalar_lea.vmem [#allocation6], %s173
        // Predicated region
        $region37: #{tpu_custom_call.1} parent=31 // pred_check
          %p175 = pneg %p63
        $region38: #{tpu_custom_call.1} parent=31 // pred_check_branch
          %177 = sbr.rel (%p175) target = $region40
        $region39: #{tpu_custom_call.1} parent=31 // pred_region
          %178 = dma.done %s171, 128
        $region40: #{tpu_custom_call.1} parent=31 // pred_fallthru
          _
        %179 = sfence
        %p180 = pneg %p37
        %p181 = pneg %p34
        %s182 = sand.u32 %s50, 1
        %s183 = scalar_lea.sflag [#allocation3], %s182
        %s184 = sand.u32 %s50, 1
        %s185 = smul.addr %s184, 8
        %s186 = scalar_lea.vmem [#allocation6], %s185
        %p187 = pneg %p63
        %p188 = pneg %p60
        %p189 = pneg %p84
        %p190 = pneg %p81
        %p191 = pneg %p110
        %p192 = pneg %p107
        %s193 = sand.u32 %s97, 1
        %s194 = scalar_lea.sflag [#allocation4], %s193
        %s195 = sand.u32 %s97, 1
        %s196 = smul.addr %s195, 8
        %s197 = scalar_lea.vmem [#allocation7], %s196
        %s198 = sld [smem:[#allocation2]]
        %s199 = sld [smem:[#allocation2 + $0x1]]
        %s200 = sld [smem:[#allocation2 + $0x2]]
        %s201 = sld [smem:[#allocation2 + $0x3]]
        %s202 = sld [smem:[#allocation2 + $0x4]]
        %s203 = sld [smem:[#allocation2 + $0x5]]
        %v204 = vld [vmem:[%s174] sm:$0xff]
        %v205 = vstv %s198
        %v206 = vmul.f32 %v204, %v205
        %v207 = vstv %s199
        %v208 = vadd.f32 %v206, %v207
        %v209 = vstv %s200
        %v210 = vmul.f32 %v209, %v204
        %v211 = vstv %s201
        %v212 = vadd.f32 %v210, %v211
        %v213 = vmul.f32 %v212, %v204
        %v214 = vstv %s202
        %v215 = vadd.f32 %v213, %v214
        %v216 = vrsqrt.pop %v215
        %v217 = vmul.f32 %v208, %v216
        %vm218 = vcmask 130048
        %v219 = vsel %vm218, %v217, 0.0
        %220 = vadd.xlane.f32.xlu0 %v219
        %v221 = vpop.xlane.xlu0 %220
        %v222 = vstv %s203
        %v223 = vadd.f32 %v221, %v222
        %v224 = vld [vmem:[%s2] sm:$0x1]
        %v226 = vlaneseq
        %v227 = vshrl.u32 %v226, 7
        %v228 = vsub.s32 0, %v227
        %v229 = vrot.slane %v224, %v228
        %v231 = vmul.f32 %v223, %v229
        %vm232 = vcmask 261120
        %233 = vst.msk [vmem:[%s197] sm:$0xff] %vm232, %v231
        %s234 = sand.u32 %s97, 1
        %s235 = scalar_lea.sflag [#allocation4], %s234
        %s236 = sand.u32 %s97, 1
        %s237 = smul.addr %s236, 8
        %s238 = scalar_lea.vmem [#allocation7], %s237
        // Predicated region
        $region41: #{tpu_custom_call.1} parent=31 // pred_check
          %p239 = pneg %p107
        $region42: #{tpu_custom_call.1} parent=31 // pred_check_branch
          %241 = sbr.rel (%p239) target = $region44
        $region43: #{tpu_custom_call.1} parent=31 // pred_region
          %s243 = ssub.s32 128, 128
          %244 = vsyncadd %s235, %s243
          %s245 = smul.addr %s21, 128
          %s246 = scalar_lea.hbm %s3, %s245
          %s248 = sshll.u32 %s238, 4
          %s249 = int_to_ptr.vmem [resolvable:$true] %s248
          %251 = dma.vmem_to_hbm [thread:$0]  %s249, 128, %s246, %s235
        $region44: #{tpu_custom_call.1} parent=31 // pred_fallthru
          _
      $region32: #{tpu_custom_call.1} parent=5 // pred_fallthru
        _
      %p252 = scmp.le.s32.totalorder 2, %s16
      // Predicated region
      $region45: #{tpu_custom_call.1} parent=5 // pred_check
        %p253 = pneg %p252
      $region46: #{tpu_custom_call.1} parent=5 // pred_check_branch
        %255 = sbr.rel (%p253) target = $region48
      $region47: #{tpu_custom_call.1} parent=5 // pred_region
        %s256 = ssub.s32 %s16, 2
        // Predicated region
        $region49: #{tpu_custom_call.1} parent=47 // pred_check
          %p257 = pneg %p113
        $region50: #{tpu_custom_call.1} parent=47 // pred_check_branch
          %259 = sbr.rel (%p257) target = $region52
        $region51: #{tpu_custom_call.1} parent=47 // pred_region
          %s260 = sand.u32 %s98, 1
          %s261 = scalar_lea.sflag [#allocation4], %s260
          %s262 = sand.u32 %s98, 1
          %s263 = smul.addr %s262, 8
          %s264 = scalar_lea.vmem [#allocation7], %s263
          %265 = dma.done %s261, 128
        $region52: #{tpu_custom_call.1} parent=47 // pred_fallthru
          _
      $region48: #{tpu_custom_call.1} parent=5 // pred_fallthru
        _
    $region6: #{tpu_custom_call.1} parent=1 // loop_footer
      %s20 = sadd.s32 1, %s16
    $region7: #{tpu_custom_call.1} parent=1 // loop_footer_branch
      %15 = sbr.rel target = $region3
    $region8: #{tpu_custom_call.1} parent=1 // loop_exit
      _
    %266 = vsyncpa [#allocation3], 1
    %s267 = scalar_lea.sflag [#allocation3], 1
    %268 = vsyncpa %s267, 1
    %269 = vsyncpa [#allocation4], 1
    %s270 = scalar_lea.sflag [#allocation4], 1
    %271 = vsyncpa %s270, 1
    %272 = vsyncpa [#allocation5], 1
    %s273 = scalar_lea.sflag [#allocation5], 1
    %274 = vsyncpa %s273, 1

</llo_original>
